<compile_context>
chip_gen: v7x
topology: tpu7x:2x2x1
jax: 0.10.0
libtpu: 0.0.40
codegen_flags: <defaults>
</compile_context>

<pallas_src>
import functools

import jax
import jax.numpy as jnp
from jax import lax
from jax.experimental import pallas as pl
from jax.experimental.pallas import tpu as pltpu


def _round_up(a, b):
    return (a + b - 1) // b * b


def _vmem_capacity_bytes():
    """Per-core VMEM capacity in bytes (conservative 64 MiB fallback = v7x)."""
    try:
        info = pltpu.get_tpu_info()
        cap = getattr(info, "vmem_capacity_bytes", None)
        if cap:
            return int(cap)
    except Exception:
        pass
    try:
        kind = jax.devices()[0].device_kind.lower()
        if any(t in kind for t in ("v5 lite", "v5e", "v5lite", "v6", "trillium")):
            return 128 << 20
    except Exception:
        pass
    return 64 << 20


def _vq_search_kernel(x_ref, e_ref, e2_ref, ind_ref, m_sc, ind_sc, *, sub_tile):
    """One (row-tile, code-block) step of the nearest-codeword search.

    x_ref  : (rt, D)         samples (native dtype)
    e_ref  : (ct, D)         codebook block (ct is a multiple of sub_tile)
    e2_ref : (ct, 1)  f32    0.5 * ||e||^2  (+inf on padded codes)
    ind_ref: (8, rt)  int32  best-code index output (sublane-replicated)
    m_sc   : (1, rt)  f32    running best score scratch
    ind_sc : (1, rt)  int32  running best index scratch
    """
    j = pl.program_id(1)                       # codebook-block index (reduction)
    ct = e_ref.shape[0]
    rt = x_ref.shape[0]
    num_sub = ct // sub_tile

    @pl.when(j == 0)
    def _():
        m_sc[...] = jnp.full(m_sc.shape, -jnp.inf, dtype=m_sc.dtype)
        ind_sc[...] = jnp.zeros(ind_sc.shape, dtype=ind_sc.dtype)

    x = x_ref[...]                             # native dtype -> MXU directly
    # Constant across sub-tiles; generated once per grid step (hoisted).
    code_ids = lax.broadcasted_iota(jnp.int32, (sub_tile, rt), 0)
    sentinel = jnp.int32(sub_tile)
    base = j * ct

    def step(s, carry):
        m, ind = carry
        off = s * sub_tile
        if not isinstance(off, int):
            off = pl.multiple_of(off, sub_tile)
        e = e_ref[pl.ds(off, sub_tile), :]
        e2 = e2_ref[pl.ds(off, sub_tile), :]
        # (sub_tile, rt) = e @ x^T, contracting trailing dims, f32 accumulate.
        xe = lax.dot_general(
            e, x,
            dimension_numbers=(((1,), (1,)), ((), ())),
            preferred_element_type=jnp.float32,
        )
        # 0.5-scaled score: <e,x> - 0.5*||e||^2 ; ||x||^2 dropped.  Both are
        # argmax-invariant.  Padded codes have e2 = +inf -> score = -inf.
        dist = xe - e2
        tile_max = jnp.max(dist, axis=0, keepdims=True)                # (1, rt)
        local_arg = jnp.min(jnp.where(dist == tile_max, code_ids, sentinel),
                            axis=0, keepdims=True)                     # (1, rt)
        global_arg = local_arg + (base + off)
        # strict '>' keeps the first (lowest-index) maximum across sub-tiles,
        # matching jnp.argmax tie-breaking in exact arithmetic.
        better = tile_max > m
        return (jnp.where(better, tile_max, m),
                jnp.where(better, global_arg, ind))

    carry = (m_sc[...], ind_sc[...])
    if num_sub <= 8:                       # short fixed trip count: unroll
        for s in range(num_sub):
            carry = step(s, carry)
    else:
        carry = lax.fori_loop(0, num_sub, step, carry)
    m_sc[...], ind_sc[...] = carry

    @pl.when(j == pl.num_programs(1) - 1)
    def _():
        ind_ref[...] = jnp.broadcast_to(ind_sc[...], ind_ref.shape)


def euclidean_codebook_forward(
    x,
    embed,
    *,
    row_tile=512,
    code_sub_tile=256,
    vmem_budget_bytes=None,
):
    """quantize, embed_ind = EuclideanCodebook.forward(x)  (eval mode)."""
    orig_shape = x.shape
    dim = orig_shape[-1]
    flatten = x.reshape(-1, dim)
    n = flatten.shape[0]
    c = embed.shape[0]
    x_item = jnp.dtype(flatten.dtype).itemsize
    e_item = x_item                              # codebook is cast to x dtype

    capacity = _vmem_capacity_bytes()
    if vmem_budget_bytes is None:
        vmem_budget_bytes = capacity - (16 << 20)   # headroom / Mosaic scratch
    budget = max(int(vmem_budget_bytes), 8 << 20)

    # ---- row tiling (samples; lane-dense, MXU-aligned multiples of 128) ----
    rt = max(128, _round_up(min(row_tile, 1024), 128))
    rt = min(rt, max(128, _round_up(n, 128)))
    if n > 256 and _round_up(n, rt) == rt:
        # split into >=2 row tiles so the "parallel" axis can use both cores
        rt = max(128, _round_up(-(-n // 2), 128))
    n_pad = _round_up(n, rt)
    num_row_tiles = n_pad // rt

    # ---- code tiling ------------------------------------------------------
    st = max(128, _round_up(min(code_sub_tile, _round_up(c, 128)), 128))
    c_pad_min = _round_up(c, st)
    dist_bytes = st * rt * 4                     # bounded f32 dist sub-tile
    fixed = (2 * rt * dim * x_item               # double-buffered x block
             + dist_bytes
             + 2 * 8 * rt * 4 + 2 * rt * 8       # out block + scratch state
             + (2 << 20))                        # compiler margin

    def _bytes_for(ct):                          # codebook + e2 double-buffered
        return fixed + 2 * (ct * dim * e_item + ct * 4)

    if _bytes_for(c_pad_min) <= budget:
        ct = c_pad_min                           # fully VMEM-resident codebook
    else:
        ct = st                                  # streamed reduction tiles
        k = min(c_pad_min, 8192) // st
        while k >= 1:
            if _bytes_for(k * st) <= budget:
                ct = k * st
                break
            k -= 1
    c_pad = _round_up(c, ct)
    num_code_tiles = c_pad // ct

    est = _bytes_for(ct)
    vmem_limit = int(min(capacity - (8 << 20), max(est + (4 << 20), 32 << 20)))

    # ---- operand prep ------------------------------------------------------
    if n_pad > n:
        flatten = jnp.pad(flatten, ((0, n_pad - n), (0, 0)))
    embed_p = embed if embed.dtype == flatten.dtype else embed.astype(flatten.dtype)
    # 0.5*||e||^2 so the kernel needs no 2x scale (argmax-invariant).
    e2 = 0.5 * jnp.sum(embed.astype(jnp.float32) ** 2, axis=-1, keepdims=True)
    if c_pad > c:
        embed_p = jnp.pad(embed_p, ((0, c_pad - c), (0, 0)))
        e2 = jnp.pad(e2, ((0, c_pad - c), (0, 0)), constant_values=jnp.inf)

    kernel = functools.partial(_vq_search_kernel, sub_tile=st)
    ind3d = pl.pallas_call(
        kernel,
        out_shape=jax.ShapeDtypeStruct((num_row_tiles, 8, rt), jnp.int32),
        grid_spec=pltpu.PrefetchScalarGridSpec(
            num_scalar_prefetch=0,
            grid=(num_row_tiles, num_code_tiles),
            in_specs=[
                pl.BlockSpec((rt, dim), lambda i, j: (i, 0)),   # samples
                pl.BlockSpec((ct, dim), lambda i, j: (j, 0)),   # codebook block
                pl.BlockSpec((ct, 1), lambda i, j: (j, 0)),     # 0.5*||e||^2
            ],
            out_specs=pl.BlockSpec((None, 8, rt), lambda i, j: (i, 0, 0)),
            scratch_shapes=[pltpu.VMEM((1, rt), jnp.float32),
                            pltpu.VMEM((1, rt), jnp.int32)],
        ),
        compiler_params=pltpu.CompilerParams(
            dimension_semantics=("parallel", "arbitrary"),
            vmem_limit_bytes=vmem_limit,
        ),
    )(flatten, embed_p, e2)

    flat_ind = ind3d[:, 0, :].reshape(-1)[:n]
    # Codebook gather (F.embedding) done once outside the reduction loop.
    quantize = jnp.take(embed, flat_ind, axis=0).reshape(orig_shape)
    embed_ind = flat_ind.reshape(orig_shape[:-1])
    return quantize, embed_ind


def _reference_forward(x, embed):
    """Pure-JAX mirror of the PyTorch forward (eval path) for verification."""
    shape = x.shape
    flatten = x.reshape(-1, shape[-1])
    et = embed.T
    dist = -(jnp.sum(flatten ** 2, axis=1, keepdims=True)
             - 2.0 * flatten @ et
             + jnp.sum(et ** 2, axis=0, keepdims=True))
    embed_ind = jnp.argmax(dist, axis=-1).astype(jnp.int32)
    quantize = embed[embed_ind].reshape(shape)
    return quantize, embed_ind.reshape(shape[:-1])


if __name__ == "__main__":
    dim = 32
    codebook_size = 256
    B, T = 2, 8

    key = jax.random.PRNGKey(0)
    kx, ke = jax.random.split(key)
    # Deterministic parameter init (torch.randn equivalent): embed ~ N(0, 1).
    embed = jax.random.normal(ke, (codebook_size, dim), dtype=jnp.float32)
    x = jax.random.normal(kx, (B, T, dim), dtype=jnp.float32)

    fwd = jax.jit(euclidean_codebook_forward)
    quantize, embed_ind = fwd(x, embed)
    quantize = jax.block_until_ready(quantize)
    embed_ind = jax.block_until_ready(embed_ind)

    q_ref, i_ref = _reference_forward(x, embed)
    assert quantize.shape == x.shape and embed_ind.shape == x.shape[:-1]
    assert jnp.array_equal(embed_ind, i_ref)
    assert jnp.allclose(quantize, q_ref, atol=1e-5, rtol=1e-5)

    print("KERNEL_OK")
</pallas_src>

<mosaic_0001>
module attributes {stable_mosaic.version = 11 : i64} {
  func.func @_vq_search_kernel(%arg0: i32, %arg1: i32, %arg2: memref<128x32xf32, #tpu.memory_space<vmem>>, %arg3: memref<256x32xf32, #tpu.memory_space<vmem>>, %arg4: memref<256x1xf32, #tpu.memory_space<vmem>>, %arg5: memref<1x8x128xi32, #tpu.memory_space<vmem>>, %arg6: memref<1x128xf32, #tpu.memory_space<vmem>>, %arg7: memref<1x128xi32, #tpu.memory_space<vmem>>) attributes {dimension_semantics = [#tpu.dimension_semantics<parallel>, #tpu.dimension_semantics<arbitrary>], iteration_bounds = array<i64: 1, 1>, scalar_prefetch = 0 : i64, scratch_operands = 2 : i64, tpu.core_type = #tpu.core_type<tc>, window_params = [{transform_indices = @transform_0, window_bounds = array<i64: 128, 32>}, {transform_indices = @transform_1, window_bounds = array<i64: 256, 32>}, {transform_indices = @transform_2, window_bounds = array<i64: 256, 1>}, {transform_indices = @transform_3, window_bounds = array<i64: 1, 8, 128>}]} {
    %c0_i32 = arith.constant 0 : i32
    %0 = arith.cmpi eq, %arg1, %c0_i32 : i32
    %1 = arith.extui %0 : i1 to i32
    %c0_i32_0 = arith.constant 0 : i32
    %2 = arith.cmpi ne, %1, %c0_i32_0 : i32
    scf.if %2 {
      %cst_20 = arith.constant 0xFF800000 : f32
      %32 = vector.broadcast %cst_20 : f32 to vector<1x128xf32>
      %c0_21 = arith.constant 0 : index
      %c0_22 = arith.constant 0 : index
      %33 = vector.load %arg6[%c0_21, %c0_22] : memref<1x128xf32, #tpu.memory_space<vmem>>, vector<1x128xf32>
      tpu.vector_store %arg6[%c0_21, %c0_22], %32 {strides = array<i32>} : memref<1x128xf32, #tpu.memory_space<vmem>>, vector<1x128xf32>,
      %c0_i32_23 = arith.constant 0 : i32
      %34 = vector.broadcast %c0_i32_23 : i32 to vector<1x128xi32>
      %c0_24 = arith.constant 0 : index
      %c0_25 = arith.constant 0 : index
      %35 = vector.load %arg7[%c0_24, %c0_25] : memref<1x128xi32, #tpu.memory_space<vmem>>, vector<1x128xi32>
      tpu.vector_store %arg7[%c0_24, %c0_25], %34 {strides = array<i32>} : memref<1x128xi32, #tpu.memory_space<vmem>>, vector<1x128xi32>,
    } else {
    }
    %c0 = arith.constant 0 : index
    %c0_1 = arith.constant 0 : index
    %3 = vector.load %arg2[%c0, %c0_1] : memref<128x32xf32, #tpu.memory_space<vmem>>, vector<128x32xf32>
    %4 = tpu.iota {dimensions = array<i32: 0>} : vector<256x128xi32>
    %c256_i32 = arith.constant 256 : i32
    %5 = arith.muli %arg1, %c256_i32 : i32
    %c0_2 = arith.constant 0 : index
    %c0_3 = arith.constant 0 : index
    %6 = vector.load %arg6[%c0_2, %c0_3] : memref<1x128xf32, #tpu.memory_space<vmem>>, vector<1x128xf32>
    %c0_4 = arith.constant 0 : index
    %c0_5 = arith.constant 0 : index
    %7 = vector.load %arg7[%c0_4, %c0_5] : memref<1x128xi32, #tpu.memory_space<vmem>>, vector<1x128xi32>
    %c0_6 = arith.constant 0 : index
    %c0_7 = arith.constant 0 : index
    %8 = vector.load %arg3[%c0_6, %c0_7] : memref<256x32xf32, #tpu.memory_space<vmem>>, vector<256x32xf32>
    %c0_8 = arith.constant 0 : index
    %c0_9 = arith.constant 0 : index
    %9 = vector.load %arg4[%c0_8, %c0_9] : memref<256x1xf32, #tpu.memory_space<vmem>>, vector<256x1xf32>
    %cst = arith.constant dense<0.000000e+00> : vector<256x128xf32>
    %10 = tpu.matmul %8, %3, %cst {dimension_numbers = #tpu.dot_dimension_numbers<[1], [1], [0], [0], [0, 0, 1, 0], [], []>} : vector<256x32xf32>, vector<128x32xf32>, vector<256x128xf32> -> vector<256x128xf32>
    %11 = vector.broadcast %9 : vector<256x1xf32> to vector<256x128xf32>
    %12 = arith.subf %10, %11 : vector<256x128xf32>
    %cst_10 = arith.constant dense<0xFF800000> : vector<128xf32>
    %13 = vector.multi_reduction <maximumf>, %12, %cst_10 [0] : vector<256x128xf32> to vector<128xf32>
    %14 = vector.shape_cast %13 : vector<128xf32> to vector<1x128xf32>
    %15 = vector.broadcast %14 : vector<1x128xf32> to vector<256x128xf32>
    %16 = arith.cmpf oeq, %12, %15 : vector<256x128xf32>
    %c256_i32_11 = arith.constant 256 : i32
    %17 = vector.broadcast %c256_i32_11 : i32 to vector<256x128xi32>
    %18 = arith.select %16, %4, %17 : vector<256x128xi1>, vector<256x128xi32>
    %cst_12 = arith.constant dense<2147483647> : vector<128xi32>
    %19 = vector.multi_reduction <minsi>, %18, %cst_12 [0] : vector<256x128xi32> to vector<128xi32>
    %20 = vector.shape_cast %19 : vector<128xi32> to vector<1x128xi32>
    %c0_i32_13 = arith.constant 0 : i32
    %21 = arith.addi %5, %c0_i32_13 : i32
    %22 = vector.broadcast %21 : i32 to vector<1x128xi32>
    %23 = arith.addi %20, %22 : vector<1x128xi32>
    %24 = arith.cmpf ogt, %14, %6 : vector<1x128xf32>
    %25 = arith.select %24, %14, %6 : vector<1x128xi1>, vector<1x128xf32>
    %26 = arith.select %24, %23, %7 : vector<1x128xi1>, vector<1x128xi32>
    %c0_14 = arith.constant 0 : index
    %c0_15 = arith.constant 0 : index
    %27 = vector.load %arg6[%c0_14, %c0_15] : memref<1x128xf32, #tpu.memory_space<vmem>>, vector<1x128xf32>
    tpu.vector_store %arg6[%c0_14, %c0_15], %25 {strides = array<i32>} : memref<1x128xf32, #tpu.memory_space<vmem>>, vector<1x128xf32>,
    %c0_16 = arith.constant 0 : index
    %c0_17 = arith.constant 0 : index
    %28 = vector.load %arg7[%c0_16, %c0_17] : memref<1x128xi32, #tpu.memory_space<vmem>>, vector<1x128xi32>
    tpu.vector_store %arg7[%c0_16, %c0_17], %26 {strides = array<i32>} : memref<1x128xi32, #tpu.memory_space<vmem>>, vector<1x128xi32>,
    %c0_i32_18 = arith.constant 0 : i32
    %29 = arith.cmpi eq, %arg1, %c0_i32_18 : i32
    %30 = arith.extui %29 : i1 to i32
    %c0_i32_19 = arith.constant 0 : i32
    %31 = arith.cmpi ne, %30, %c0_i32_19 : i32
    scf.if %31 {
      %c0_20 = arith.constant 0 : index
      %c0_21 = arith.constant 0 : index
      %32 = vector.load %arg7[%c0_20, %c0_21] : memref<1x128xi32, #tpu.memory_space<vmem>>, vector<1x128xi32>
      %33 = vector.shape_cast %32 : vector<1x128xi32> to vector<1x128xi32>
      %34 = vector.broadcast %33 : vector<1x128xi32> to vector<8x128xi32>
      %c0_22 = arith.constant 0 : index
      %c0_23 = arith.constant 0 : index
      %c0_24 = arith.constant 0 : index
      %35 = vector.load %arg5[%c0_22, %c0_23, %c0_24] : memref<1x8x128xi32, #tpu.memory_space<vmem>>, vector<1x8x128xi32>
      %36 = vector.shape_cast %35 : vector<1x8x128xi32> to vector<8x128xi32>
      %37 = vector.shape_cast %34 : vector<8x128xi32> to vector<1x8x128xi32>
      tpu.vector_store %arg5[%c0_22, %c0_23, %c0_24], %37 {strides = array<i32>} : memref<1x8x128xi32, #tpu.memory_space<vmem>>, vector<1x8x128xi32>,
    } else {
    }
    return
  }
  func.func @transform_0(%arg0: i32, %arg1: i32) -> (i32, i32) {
    %c0_i32 = arith.constant 0 : i32
    %c0_i32_0 = arith.constant 0 : i32
    return %arg0, %c0_i32 : i32, i32
  }
  func.func @transform_1(%arg0: i32, %arg1: i32) -> (i32, i32) {
    %c0_i32 = arith.constant 0 : i32
    %c0_i32_0 = arith.constant 0 : i32
    return %arg1, %c0_i32 : i32, i32
  }
  func.func @transform_2(%arg0: i32, %arg1: i32) -> (i32, i32) {
    %c0_i32 = arith.constant 0 : i32
    %c0_i32_0 = arith.constant 0 : i32
    return %arg1, %c0_i32 : i32, i32
  }
  func.func @transform_3(%arg0: i32, %arg1: i32) -> (i32, i32, i32) {
    %c0_i32 = arith.constant 0 : i32
    %c0_i32_0 = arith.constant 0 : i32
    %c0_i32_1 = arith.constant 0 : i32
    return %arg0, %c0_i32, %c0_i32_0 : i32, i32, i32
  }
}

</mosaic_0001>

<llo_original>
// kernel: euclidean_codebook_forward.1
$region0: #{euclidean_codebook_forward.1}
  #allocation0 [shape = 'u32[]', space=smem, size = 0x4, offset = 0x4, fixed_abs, tag = 'smem constant byte address 0x4 - core index']
  #allocation1 [shape = 'u32[144,128]{1,0:T(1,128)}', space=vmem, size = 0x12000, scoped, tag = 'internal scratch']
  #allocation2 [shape = 'f32[1,128]{1,0:T(1,128)}', space=vmem, size = 0x200, scoped, tag = 'scratch operand']
  #allocation3 [shape = 's32[1,128]{1,0:T(1,128)}', space=vmem, size = 0x200, scoped, tag = 'scratch operand']
  %s0 = inlined_call_operand.vmem [shape: f32[128,32], index: 0, kind: input, shape index: {}]
  %s1 = inlined_call_operand.vmem [shape: f32[256,32], index: 1, kind: input, shape index: {}]
  %s2 = inlined_call_operand.vmem [shape: f32[256,1], index: 2, kind: input, shape index: {}]
  %s3 = inlined_call_operand.vmem [shape: s32[1,8,128], index: 3, kind: output, shape index: {}]
  %s4 = sld [smem:[#allocation0]]
  $region30: #{euclidean_codebook_forward.1} parent=0
    _
  %s6 = ssub.s32 1, %s4
  %s7 = scalar_select 0, %s6, %s4
  // Predicated region
  $region2: #{euclidean_codebook_forward.1} parent=0 // pred_check
    _
  $region3: #{euclidean_codebook_forward.1} parent=0 // pred_check_branch
    %9 = sbr.rel (0) target = $region5
  $region4: #{euclidean_codebook_forward.1} parent=0 // pred_region
    _
  $region5: #{euclidean_codebook_forward.1} parent=0 // pred_fallthru
    _
  // Predicated region
  $region6: #{euclidean_codebook_forward.1} parent=0 // pred_check
    _
  $region7: #{euclidean_codebook_forward.1} parent=0 // pred_check_branch
    %11 = sbr.rel (0) target = $region9
  $region8: #{euclidean_codebook_forward.1} parent=0 // pred_region
    _
  $region9: #{euclidean_codebook_forward.1} parent=0 // pred_fallthru
    _
  // Predicated region
  $region10: #{euclidean_codebook_forward.1} parent=0 // pred_check
    _
  $region11: #{euclidean_codebook_forward.1} parent=0 // pred_check_branch
    %13 = sbr.rel (0) target = $region13
  $region12: #{euclidean_codebook_forward.1} parent=0 // pred_region
    _
  $region13: #{euclidean_codebook_forward.1} parent=0 // pred_fallthru
    _
  %p14 = scmp.eq.s32.totalorder 0, 0
  // Predicated region
  $region14: #{euclidean_codebook_forward.1} parent=0 // pred_check
    %p15 = pneg %p14
  $region15: #{euclidean_codebook_forward.1} parent=0 // pred_check_branch
    %17 = sbr.rel (%p15) target = $region17
  $region16: #{euclidean_codebook_forward.1} parent=0 // pred_region
    %18 = vst [vmem:[#allocation2] sm:$0x1] -inf
    %19 = vst [vmem:[#allocation3] sm:$0x1] 0
  $region17: #{euclidean_codebook_forward.1} parent=0 // pred_fallthru
    _
  %v20 = vld [vmem:[%s0] sm:$0xff]
  %v21 = vld [vmem:[%s0 + $0x8] sm:$0xff]
  %v22 = vld [vmem:[%s0 + $0x10] sm:$0xff]
  %v23 = vld [vmem:[%s0 + $0x18] sm:$0xff]
  %v24 = vld [vmem:[%s0 + $0x20] sm:$0xff]
  %v25 = vld [vmem:[%s0 + $0x28] sm:$0xff]
  %v26 = vld [vmem:[%s0 + $0x30] sm:$0xff]
  %v27 = vld [vmem:[%s0 + $0x38] sm:$0xff]
  %v28 = vld [vmem:[%s0 + $0x40] sm:$0xff]
  %v29 = vld [vmem:[%s0 + $0x48] sm:$0xff]
  %v30 = vld [vmem:[%s0 + $0x50] sm:$0xff]
  %v31 = vld [vmem:[%s0 + $0x58] sm:$0xff]
  %v32 = vld [vmem:[%s0 + $0x60] sm:$0xff]
  %v33 = vld [vmem:[%s0 + $0x68] sm:$0xff]
  %v34 = vld [vmem:[%s0 + $0x70] sm:$0xff]
  %v35 = vld [vmem:[%s0 + $0x78] sm:$0xff]
  %v36 = vlaneseq
  %v37 = vshrl.u32 %v36, 7
  %v38 = vadd.s32 %v37, 8
  %v39 = vadd.s32 %v37, 16
  %v40 = vadd.s32 %v37, 24
  %v41 = vadd.s32 %v37, 32
  %v42 = vadd.s32 %v37, 40
  %v43 = vadd.s32 %v37, 48
  %v44 = vadd.s32 %v37, 56
  %v45 = vadd.s32 %v37, 64
  %v46 = vadd.s32 %v37, 72
  %v47 = vadd.s32 %v37, 80
  %v48 = vadd.s32 %v37, 88
  %v49 = vadd.s32 %v37, 96
  %v50 = vadd.s32 %v37, 104
  %v51 = vadd.s32 %v37, 112
  %v52 = vadd.s32 %v37, 120
  %v53 = vadd.s32 %v37, 128
  %v54 = vadd.s32 %v37, 136
  %v55 = vadd.s32 %v37, 144
  %v56 = vadd.s32 %v37, 152
  %v57 = vadd.s32 %v37, 160
  %v58 = vadd.s32 %v37, 168
  %v59 = vadd.s32 %v37, 176
  %v60 = vadd.s32 %v37, 184
  %v61 = vadd.s32 %v37, 192
  %v62 = vadd.s32 %v37, 200
  %v63 = vadd.s32 %v37, 208
  %v64 = vadd.s32 %v37, 216
  %v65 = vadd.s32 %v37, 224
  %v66 = vadd.s32 %v37, 232
  %v67 = vadd.s32 %v37, 240
  %v68 = vadd.s32 %v37, 248
  %s69 = smul.u32 0, 256
  %v70 = vld [vmem:[#allocation2] sm:$0x1]
  %v71 = vld [vmem:[#allocation3] sm:$0x1]
  %v72 = vld [vmem:[%s1] sm:$0xff]
  %v73 = vld [vmem:[%s1 + $0x8] sm:$0xff]
  %v74 = vld [vmem:[%s1 + $0x10] sm:$0xff]
  %v75 = vld [vmem:[%s1 + $0x18] sm:$0xff]
  %v76 = vld [vmem:[%s1 + $0x20] sm:$0xff]
  %v77 = vld [vmem:[%s1 + $0x28] sm:$0xff]
  %v78 = vld [vmem:[%s1 + $0x30] sm:$0xff]
  %v79 = vld [vmem:[%s1 + $0x38] sm:$0xff]
  %v80 = vld [vmem:[%s1 + $0x40] sm:$0xff]
  %v81 = vld [vmem:[%s1 + $0x48] sm:$0xff]
  %v82 = vld [vmem:[%s1 + $0x50] sm:$0xff]
  %v83 = vld [vmem:[%s1 + $0x58] sm:$0xff]
  %v84 = vld [vmem:[%s1 + $0x60] sm:$0xff]
  %v85 = vld [vmem:[%s1 + $0x68] sm:$0xff]
  %v86 = vld [vmem:[%s1 + $0x70] sm:$0xff]
  %v87 = vld [vmem:[%s1 + $0x78] sm:$0xff]
  %v88 = vld [vmem:[%s1 + $0x80] sm:$0xff]
  %v89 = vld [vmem:[%s1 + $0x88] sm:$0xff]
  %v90 = vld [vmem:[%s1 + $0x90] sm:$0xff]
  %v91 = vld [vmem:[%s1 + $0x98] sm:$0xff]
  %v92 = vld [vmem:[%s1 + $0xa0] sm:$0xff]
  %v93 = vld [vmem:[%s1 + $0xa8] sm:$0xff]
  %v94 = vld [vmem:[%s1 + $0xb0] sm:$0xff]
  %v95 = vld [vmem:[%s1 + $0xb8] sm:$0xff]
  %v96 = vld [vmem:[%s1 + $0xc0] sm:$0xff]
  %v97 = vld [vmem:[%s1 + $0xc8] sm:$0xff]
  %v98 = vld [vmem:[%s1 + $0xd0] sm:$0xff]
  %v99 = vld [vmem:[%s1 + $0xd8] sm:$0xff]
  %v100 = vld [vmem:[%s1 + $0xe0] sm:$0xff]
  %v101 = vld [vmem:[%s1 + $0xe8] sm:$0xff]
  %v102 = vld [vmem:[%s1 + $0xf0] sm:$0xff]
  %v103 = vld [vmem:[%s1 + $0xf8] sm:$0xff]
  %v104 = vld [vmem:[%s2] sm:$0xff]
  %v105 = vld [vmem:[%s2 + $0x8] sm:$0xff]
  %v106 = vld [vmem:[%s2 + $0x10] sm:$0xff]
  %v107 = vld [vmem:[%s2 + $0x18] sm:$0xff]
  %v108 = vld [vmem:[%s2 + $0x20] sm:$0xff]
  %v109 = vld [vmem:[%s2 + $0x28] sm:$0xff]
  %v110 = vld [vmem:[%s2 + $0x30] sm:$0xff]
  %v111 = vld [vmem:[%s2 + $0x38] sm:$0xff]
  %v112 = vld [vmem:[%s2 + $0x40] sm:$0xff]
  %v113 = vld [vmem:[%s2 + $0x48] sm:$0xff]
  %v114 = vld [vmem:[%s2 + $0x50] sm:$0xff]
  %v115 = vld [vmem:[%s2 + $0x58] sm:$0xff]
  %v116 = vld [vmem:[%s2 + $0x60] sm:$0xff]
  %v117 = vld [vmem:[%s2 + $0x68] sm:$0xff]
  %v118 = vld [vmem:[%s2 + $0x70] sm:$0xff]
  %v119 = vld [vmem:[%s2 + $0x78] sm:$0xff]
  %v120 = vld [vmem:[%s2 + $0x80] sm:$0xff]
  %v121 = vld [vmem:[%s2 + $0x88] sm:$0xff]
  %v122 = vld [vmem:[%s2 + $0x90] sm:$0xff]
  %v123 = vld [vmem:[%s2 + $0x98] sm:$0xff]
  %v124 = vld [vmem:[%s2 + $0xa0] sm:$0xff]
  %v125 = vld [vmem:[%s2 + $0xa8] sm:$0xff]
  %v126 = vld [vmem:[%s2 + $0xb0] sm:$0xff]
  %v127 = vld [vmem:[%s2 + $0xb8] sm:$0xff]
  %v128 = vld [vmem:[%s2 + $0xc0] sm:$0xff]
  %v129 = vld [vmem:[%s2 + $0xc8] sm:$0xff]
  %v130 = vld [vmem:[%s2 + $0xd0] sm:$0xff]
  %v131 = vld [vmem:[%s2 + $0xd8] sm:$0xff]
  %v132 = vld [vmem:[%s2 + $0xe0] sm:$0xff]
  %v133 = vld [vmem:[%s2 + $0xe8] sm:$0xff]
  %v134 = vld [vmem:[%s2 + $0xf0] sm:$0xff]
  %v135 = vld [vmem:[%s2 + $0xf8] sm:$0xff]
  %vm136 = vcmask 261120
  %v138 = vsel %vm136, %v72, 0
  %v141 = vsel %vm136, %v73, 0
  %v144 = vsel %vm136, %v74, 0
  %v147 = vsel %vm136, %v75, 0
  %v150 = vsel %vm136, %v76, 0
  %v153 = vsel %vm136, %v77, 0
  %v156 = vsel %vm136, %v78, 0
  %v159 = vsel %vm136, %v79, 0
  %v162 = vsel %vm136, %v80, 0
  %v165 = vsel %vm136, %v81, 0
  %v168 = vsel %vm136, %v82, 0
  %v171 = vsel %vm136, %v83, 0
  %v174 = vsel %vm136, %v84, 0
  %v177 = vsel %vm136, %v85, 0
  %v180 = vsel %vm136, %v86, 0
  %v183 = vsel %vm136, %v87, 0
  %v186 = vsel %vm136, %v88, 0
  %v189 = vsel %vm136, %v89, 0
  %v192 = vsel %vm136, %v90, 0
  %v195 = vsel %vm136, %v91, 0
  %v198 = vsel %vm136, %v92, 0
  %v201 = vsel %vm136, %v93, 0
  %v204 = vsel %vm136, %v94, 0
  %v207 = vsel %vm136, %v95, 0
  %v210 = vsel %vm136, %v96, 0
  %v213 = vsel %vm136, %v97, 0
  %v216 = vsel %vm136, %v98, 0
  %v219 = vsel %vm136, %v99, 0
  %v222 = vsel %vm136, %v100, 0
  %v225 = vsel %vm136, %v101, 0
  %v228 = vsel %vm136, %v102, 0
  %v231 = vsel %vm136, %v103, 0
  %v234 = vsel %vm136, %v20, 0
  %v237 = vsel %vm136, %v21, 0
  %v240 = vsel %vm136, %v22, 0
  %v243 = vsel %vm136, %v23, 0
  %v246 = vsel %vm136, %v24, 0
  %v249 = vsel %vm136, %v25, 0
  %v252 = vsel %vm136, %v26, 0
  %v255 = vsel %vm136, %v27, 0
  %v258 = vsel %vm136, %v28, 0
  %v261 = vsel %vm136, %v29, 0
  %v264 = vsel %vm136, %v30, 0
  %v267 = vsel %vm136, %v31, 0
  %v270 = vsel %vm136, %v32, 0
  %v273 = vsel %vm136, %v33, 0
  %v276 = vsel %vm136, %v34, 0
  %v279 = vsel %vm136, %v35, 0
  %281 = vmatprep.subr.mxu0 0.0
  %282 = vmatpush1.xpose.msra.mxu0 %v234
  %283 = vmatprep.subr.mxu0 0.0
  %284 = vmatpush1.xpose.msra.mxu0 %v237
  %285 = vmatprep.subr.mxu0 0.0
  %286 = vmatpush1.xpose.msra.mxu0 %v240
  %287 = vmatprep.subr.mxu0 0.0
  %288 = vmatpush1.xpose.msra.mxu0 %v243
  %289 = vmatprep.subr.mxu0 0.0
  %290 = vmatpush1.xpose.msra.mxu0 %v246
  %291 = vmatprep.subr.mxu0 0.0
  %292 = vmatpush1.xpose.msra.mxu0 %v249
  %293 = vmatprep.subr.mxu0 0.0
  %294 = vmatpush1.xpose.msra.mxu0 %v252
  %295 = vmatprep.subr.mxu0 0.0
  %296 = vmatpush1.xpose.msra.mxu0 %v255
  %297 = vmatprep.subr.mxu0 0.0
  %298 = vmatpush1.xpose.msra.mxu0 %v258
  %299 = vmatprep.subr.mxu0 0.0
  %300 = vmatpush1.xpose.msra.mxu0 %v261
  %301 = vmatprep.subr.mxu0 0.0
  %302 = vmatpush1.xpose.msra.mxu0 %v264
  %303 = vmatprep.subr.mxu0 0.0
  %304 = vmatpush1.xpose.msra.mxu0 %v267
  %305 = vmatprep.subr.mxu0 0.0
  %306 = vmatpush1.xpose.msra.mxu0 %v270
  %307 = vmatprep.subr.mxu0 0.0
  %308 = vmatpush1.xpose.msra.mxu0 %v273
  %309 = vmatprep.subr.mxu0 0.0
  %310 = vmatpush1.xpose.msra.mxu0 %v276
  %311 = vmatprep.subr.mxu0 0.0
  %312 = vmatpush1.xpose.msra.mxu0 %v279
  %313 = vmatprep.subr.mxu0 0.0
  %314 = vmatpush1.xpose.msra.mxu0 0.0
  %315 = vmatprep.subr.mxu0 0.0
  %316 = vmatpush1.xpose.msra.mxu0 0.0
  %317 = vmatprep.subr.mxu0 0.0
  %318 = vmatpush1.xpose.msra.mxu0 0.0
  %319 = vmatprep.subr.mxu0 0.0
  %320 = vmatpush1.xpose.msra.mxu0 0.0
  %321 = vmatprep.subr.mxu0 0.0
  %322 = vmatpush1.xpose.msra.mxu0 0.0
  %323 = vmatprep.subr.mxu0 0.0
  %324 = vmatpush1.xpose.msra.mxu0 0.0
  %325 = vmatprep.subr.mxu0 0.0
  %326 = vmatpush1.xpose.msra.mxu0 0.0
  %327 = vmatprep.subr.mxu0 0.0
  %328 = vmatpush1.xpose.msra.mxu0 0.0
  %329 = vmatprep.subr.mxu0 0.0
  %330 = vmatpush1.xpose.msra.mxu0 0.0
  %331 = vmatprep.subr.mxu0 0.0
  %332 = vmatpush1.xpose.msra.mxu0 0.0
  %333 = vmatprep.subr.mxu0 0.0
  %334 = vmatpush1.xpose.msra.mxu0 0.0
  %335 = vmatprep.subr.mxu0 0.0
  %336 = vmatpush1.xpose.msra.mxu0 0.0
  %337 = vmatprep.subr.mxu0 0.0
  %338 = vmatpush1.xpose.msra.mxu0 0.0
  %339 = vmatprep.subr.mxu0 0.0
  %340 = vmatpush1.xpose.msra.mxu0 0.0
  %341 = vmatprep.subr.mxu0 0.0
  %342 = vmatpush1.xpose.msra.mxu0 0.0
  %343 = vmatprep.subr.mxu0 0.0
  %344 = vmatpush1.xpose.msra.mxu0 0.0
  %345 = vmatprep.mubr.f32.mxu0 0.0
  %346 = vmatmul.mubr.f32.gmra.mrb[0].mxu0 %v138
  %v347 = vpop.f32.mrb[0].mxu0
  %v348 = vadd.f32 0.0, %v347
  %v349 = vpop.f32.mrb[0].mxu0
  %350 = vmatprep.mubr.f32.mxu0 0.0
  %351 = vmatmul.mubr.f32.gmra.mrb[0].mxu0 %v141
  %v352 = vpop.f32.mrb[0].mxu0
  %v353 = vadd.f32 0.0, %v352
  %v354 = vpop.f32.mrb[0].mxu0
  %355 = vmatprep.mubr.f32.mxu0 0.0
  %356 = vmatmul.mubr.f32.gmra.mrb[0].mxu0 %v144
  %v357 = vpop.f32.mrb[0].mxu0
  %v358 = vadd.f32 0.0, %v357
  %v359 = vpop.f32.mrb[0].mxu0
  %360 = vmatprep.mubr.f32.mxu0 0.0
  %361 = vmatmul.mubr.f32.gmra.mrb[0].mxu0 %v147
  %v362 = vpop.f32.mrb[0].mxu0
  %v363 = vadd.f32 0.0, %v362
  %v364 = vpop.f32.mrb[0].mxu0
  %365 = vmatprep.mubr.f32.mxu0 0.0
  %366 = vmatmul.mubr.f32.gmra.mrb[0].mxu0 %v150
  %v367 = vpop.f32.mrb[0].mxu0
  %v368 = vadd.f32 0.0, %v367
  %v369 = vpop.f32.mrb[0].mxu0
  %370 = vmatprep.mubr.f32.mxu0 0.0
  %371 = vmatmul.mubr.f32.gmra.mrb[0].mxu0 %v153
  %v372 = vpop.f32.mrb[0].mxu0
  %v373 = vadd.f32 0.0, %v372
  %v374 = vpop.f32.mrb[0].mxu0
  %375 = vmatprep.mubr.f32.mxu0 0.0
  %376 = vmatmul.mubr.f32.gmra.mrb[0].mxu0 %v156
  %v377 = vpop.f32.mrb[0].mxu0
  %v378 = vadd.f32 0.0, %v377
  %v379 = vpop.f32.mrb[0].mxu0
  %380 = vmatprep.mubr.f32.mxu0 0.0
  %381 = vmatmul.mubr.f32.gmra.mrb[0].mxu0 %v159
  %v382 = vpop.f32.mrb[0].mxu0
  %v383 = vadd.f32 0.0, %v382
  %v384 = vpop.f32.mrb[0].mxu0
  %385 = vmatprep.mubr.f32.mxu0 0.0
  %386 = vmatmul.mubr.f32.gmra.mrb[0].mxu0 %v162
  %v387 = vpop.f32.mrb[0].mxu0
  %v388 = vadd.f32 0.0, %v387
  %v389 = vpop.f32.mrb[0].mxu0
  %390 = vmatprep.mubr.f32.mxu0 0.0
  %391 = vmatmul.mubr.f32.gmra.mrb[0].mxu0 %v165
  %v392 = vpop.f32.mrb[0].mxu0
  %v393 = vadd.f32 0.0, %v392
  %v394 = vpop.f32.mrb[0].mxu0
  %395 = vmatprep.mubr.f32.mxu0 0.0
  %396 = vmatmul.mubr.f32.gmra.mrb[0].mxu0 %v168
  %v397 = vpop.f32.mrb[0].mxu0
  %v398 = vadd.f32 0.0, %v397
  %v399 = vpop.f32.mrb[0].mxu0
  %400 = vmatprep.mubr.f32.mxu0 0.0
  %401 = vmatmul.mubr.f32.gmra.mrb[0].mxu0 %v171
  %v402 = vpop.f32.mrb[0].mxu0
  %v403 = vadd.f32 0.0, %v402
  %v404 = vpop.f32.mrb[0].mxu0
  %405 = vmatprep.mubr.f32.mxu0 0.0
  %406 = vmatmul.mubr.f32.gmra.mrb[0].mxu0 %v174
  %v407 = vpop.f32.mrb[0].mxu0
  %v408 = vadd.f32 0.0, %v407
  %v409 = vpop.f32.mrb[0].mxu0
  %410 = vmatprep.mubr.f32.mxu0 0.0
  %411 = vmatmul.mubr.f32.gmra.mrb[0].mxu0 %v177
  %v412 = vpop.f32.mrb[0].mxu0
  %v413 = vadd.f32 0.0, %v412
  %v414 = vpop.f32.mrb[0].mxu0
  %415 = vmatprep.mubr.f32.mxu0 0.0
  %416 = vmatmul.mubr.f32.gmra.mrb[0].mxu0 %v180
  %v417 = vpop.f32.mrb[0].mxu0
  %v418 = vadd.f32 0.0, %v417
  %v419 = vpop.f32.mrb[0].mxu0
  %420 = vmatprep.mubr.f32.mxu0 0.0
  %421 = vmatmul.mubr.f32.gmra.mrb[0].mxu0 %v183
  %v422 = vpop.f32.mrb[0].mxu0
  %v423 = vadd.f32 0.0, %v422
  %v424 = vpop.f32.mrb[0].mxu0
  %425 = vmatprep.mubr.f32.mxu0 0.0
  %426 = vmatmul.mubr.f32.gmra.mrb[0].mxu0 %v186
  %v427 = vpop.f32.mrb[0].mxu0
  %v428 = vadd.f32 0.0, %v427
  %v429 = vpop.f32.mrb[0].mxu0
  %430 = vmatprep.mubr.f32.mxu0 0.0
  %431 = vmatmul.mubr.f32.gmra.mrb[0].mxu0 %v189
  %v432 = vpop.f32.mrb[0].mxu0
  %v433 = vadd.f32 0.0, %v432
  %v434 = vpop.f32.mrb[0].mxu0
  %435 = vmatprep.mubr.f32.mxu0 0.0
  %436 = vmatmul.mubr.f32.gmra.mrb[0].mxu0 %v192
  %v437 = vpop.f32.mrb[0].mxu0
  %v438 = vadd.f32 0.0, %v437
  %v439 = vpop.f32.mrb[0].mxu0
  %440 = vmatprep.mubr.f32.mxu0 0.0
  %441 = vmatmul.mubr.f32.gmra.mrb[0].mxu0 %v195
  %v442 = vpop.f32.mrb[0].mxu0
  %v443 = vadd.f32 0.0, %v442
  %v444 = vpop.f32.mrb[0].mxu0
  %445 = vmatprep.mubr.f32.mxu0 0.0
  %446 = vmatmul.mubr.f32.gmra.mrb[0].mxu0 %v198
  %v447 = vpop.f32.mrb[0].mxu0
  %v448 = vadd.f32 0.0, %v447
  %v449 = vpop.f32.mrb[0].mxu0
  %450 = vmatprep.mubr.f32.mxu0 0.0
  %451 = vmatmul.mubr.f32.gmra.mrb[0].mxu0 %v201
  %v452 = vpop.f32.mrb[0].mxu0
  %v453 = vadd.f32 0.0, %v452
  %v454 = vpop.f32.mrb[0].mxu0
  %455 = vmatprep.mubr.f32.mxu0 0.0
  %456 = vmatmul.mubr.f32.gmra.mrb[0].mxu0 %v204
  %v457 = vpop.f32.mrb[0].mxu0
  %v458 = vadd.f32 0.0, %v457
  %v459 = vpop.f32.mrb[0].mxu0
  %460 = vmatprep.mubr.f32.mxu0 0.0
  %461 = vmatmul.mubr.f32.gmra.mrb[0].mxu0 %v207
  %v462 = vpop.f32.mrb[0].mxu0
  %v463 = vadd.f32 0.0, %v462
  %v464 = vpop.f32.mrb[0].mxu0
  %465 = vmatprep.mubr.f32.mxu0 0.0
  %466 = vmatmul.mubr.f32.gmra.mrb[0].mxu0 %v210
  %v467 = vpop.f32.mrb[0].mxu0
  %v468 = vadd.f32 0.0, %v467
  %v469 = vpop.f32.mrb[0].mxu0
  %470 = vmatprep.mubr.f32.mxu0 0.0
  %471 = vmatmul.mubr.f32.gmra.mrb[0].mxu0 %v213
  %v472 = vpop.f32.mrb[0].mxu0
  %v473 = vadd.f32 0.0, %v472
  %v474 = vpop.f32.mrb[0].mxu0
  %475 = vmatprep.mubr.f32.mxu0 0.0
  %476 = vmatmul.mubr.f32.gmra.mrb[0].mxu0 %v216
  %v477 = vpop.f32.mrb[0].mxu0
  %v478 = vadd.f32 0.0, %v477
  %v479 = vpop.f32.mrb[0].mxu0
  %480 = vmatprep.mubr.f32.mxu0 0.0
  %481 = vmatmul.mubr.f32.gmra.mrb[0].mxu0 %v219
  %v482 = vpop.f32.mrb[0].mxu0
  %v483 = vadd.f32 0.0, %v482
  %v484 = vpop.f32.mrb[0].mxu0
  %485 = vmatprep.mubr.f32.mxu0 0.0
  %486 = vmatmul.mubr.f32.gmra.mrb[0].mxu0 %v222
  %v487 = vpop.f32.mrb[0].mxu0
  %v488 = vadd.f32 0.0, %v487
  %v489 = vpop.f32.mrb[0].mxu0
  %490 = vmatprep.mubr.f32.mxu0 0.0
  %491 = vmatmul.mubr.f32.gmra.mrb[0].mxu0 %v225
  %v492 = vpop.f32.mrb[0].mxu0
  %v493 = vadd.f32 0.0, %v492
  %v494 = vpop.f32.mrb[0].mxu0
  %495 = vmatprep.mubr.f32.mxu0 0.0
  %496 = vmatmul.mubr.f32.gmra.mrb[0].mxu0 %v228
  %v497 = vpop.f32.mrb[0].mxu0
  %v498 = vadd.f32 0.0, %v497
  %v499 = vpop.f32.mrb[0].mxu0
  %500 = vmatprep.mubr.f32.mxu0 0.0
  %501 = vmatmul.mubr.f32.gmra.mrb[0].mxu0 %v231
  %v502 = vpop.f32.mrb[0].mxu0
  %v503 = vadd.f32 0.0, %v502
  %v504 = vpop.f32.mrb[0].mxu0
  %505 = vdwg.mxu0
  %507 = vset.pattern.permute.xlu0 0
  %508 = vperm.xlu0 %507, %v104
  %v509 = vpop.permute.xlu0 %508
  %512 = vset.pattern.permute.xlu0 0
  %513 = vperm.xlu0 %512, %v105
  %v514 = vpop.permute.xlu0 %513
  %517 = vset.pattern.permute.xlu0 0
  %518 = vperm.xlu0 %517, %v106
  %v519 = vpop.permute.xlu0 %518
  %522 = vset.pattern.permute.xlu0 0
  %523 = vperm.xlu0 %522, %v107
  %v524 = vpop.permute.xlu0 %523
  %527 = vset.pattern.permute.xlu0 0
  %528 = vperm.xlu0 %527, %v108
  %v529 = vpop.permute.xlu0 %528
  %532 = vset.pattern.permute.xlu0 0
  %533 = vperm.xlu0 %532, %v109
  %v534 = vpop.permute.xlu0 %533
  %537 = vset.pattern.permute.xlu0 0
  %538 = vperm.xlu0 %537, %v110
  %v539 = vpop.permute.xlu0 %538
  %542 = vset.pattern.permute.xlu0 0
  %543 = vperm.xlu0 %542, %v111
  %v544 = vpop.permute.xlu0 %543
  %547 = vset.pattern.permute.xlu0 0
  %548 = vperm.xlu0 %547, %v112
  %v549 = vpop.permute.xlu0 %548
  %552 = vset.pattern.permute.xlu0 0
  %553 = vperm.xlu0 %552, %v113
  %v554 = vpop.permute.xlu0 %553
  %557 = vset.pattern.permute.xlu0 0
  %558 = vperm.xlu0 %557, %v114
  %v559 = vpop.permute.xlu0 %558
  %562 = vset.pattern.permute.xlu0 0
  %563 = vperm.xlu0 %562, %v115
  %v564 = vpop.permute.xlu0 %563
  %567 = vset.pattern.permute.xlu0 0
  %568 = vperm.xlu0 %567, %v116
  %v569 = vpop.permute.xlu0 %568
  %572 = vset.pattern.permute.xlu0 0
  %573 = vperm.xlu0 %572, %v117
  %v574 = vpop.permute.xlu0 %573
  %577 = vset.pattern.permute.xlu0 0
  %578 = vperm.xlu0 %577, %v118
  %v579 = vpop.permute.xlu0 %578
  %582 = vset.pattern.permute.xlu0 0
  %583 = vperm.xlu0 %582, %v119
  %v584 = vpop.permute.xlu0 %583
  %587 = vset.pattern.permute.xlu0 0
  %588 = vperm.xlu0 %587, %v120
  %v589 = vpop.permute.xlu0 %588
  %592 = vset.pattern.permute.xlu0 0
  %593 = vperm.xlu0 %592, %v121
  %v594 = vpop.permute.xlu0 %593
  %597 = vset.pattern.permute.xlu0 0
  %598 = vperm.xlu0 %597, %v122
  %v599 = vpop.permute.xlu0 %598
  %602 = vset.pattern.permute.xlu0 0
  %603 = vperm.xlu0 %602, %v123
  %v604 = vpop.permute.xlu0 %603
  %607 = vset.pattern.permute.xlu0 0
  %608 = vperm.xlu0 %607, %v124
  %v609 = vpop.permute.xlu0 %608
  %612 = vset.pattern.permute.xlu0 0
  %613 = vperm.xlu0 %612, %v125
  %v614 = vpop.permute.xlu0 %613
  %617 = vset.pattern.permute.xlu0 0
  %618 = vperm.xlu0 %617, %v126
  %v619 = vpop.permute.xlu0 %618
  %622 = vset.pattern.permute.xlu0 0
  %623 = vperm.xlu0 %622, %v127
  %v624 = vpop.permute.xlu0 %623
  %627 = vset.pattern.permute.xlu0 0
  %628 = vperm.xlu0 %627, %v128
  %v629 = vpop.permute.xlu0 %628
  %632 = vset.pattern.permute.xlu0 0
  %633 = vperm.xlu0 %632, %v129
  %v634 = vpop.permute.xlu0 %633
  %637 = vset.pattern.permute.xlu0 0
  %638 = vperm.xlu0 %637, %v130
  %v639 = vpop.permute.xlu0 %638
  %642 = vset.pattern.permute.xlu0 0
  %643 = vperm.xlu0 %642, %v131
  %v644 = vpop.permute.xlu0 %643
  %647 = vset.pattern.permute.xlu0 0
  %648 = vperm.xlu0 %647, %v132
  %v649 = vpop.permute.xlu0 %648
  %652 = vset.pattern.permute.xlu0 0
  %653 = vperm.xlu0 %652, %v133
  %v654 = vpop.permute.xlu0 %653
  %657 = vset.pattern.permute.xlu0 0
  %658 = vperm.xlu0 %657, %v134
  %v659 = vpop.permute.xlu0 %658
  %662 = vset.pattern.permute.xlu0 0
  %663 = vperm.xlu0 %662, %v135
  %v664 = vpop.permute.xlu0 %663
  %v666 = vsub.f32 %v348, %v509
  %v667 = vsub.f32 %v353, %v514
  %v668 = vsub.f32 %v358, %v519
  %v669 = vsub.f32 %v363, %v524
  %v670 = vsub.f32 %v368, %v529
  %v671 = vsub.f32 %v373, %v534
  %v672 = vsub.f32 %v378, %v539
  %v673 = vsub.f32 %v383, %v544
  %v674 = vsub.f32 %v388, %v549
  %v675 = vsub.f32 %v393, %v554
  %v676 = vsub.f32 %v398, %v559
  %v677 = vsub.f32 %v403, %v564
  %v678 = vsub.f32 %v408, %v569
  %v679 = vsub.f32 %v413, %v574
  %v680 = vsub.f32 %v418, %v579
  %v681 = vsub.f32 %v423, %v584
  %v682 = vsub.f32 %v428, %v589
  %v683 = vsub.f32 %v433, %v594
  %v684 = vsub.f32 %v438, %v599
  %v685 = vsub.f32 %v443, %v604
  %v686 = vsub.f32 %v448, %v609
  %v687 = vsub.f32 %v453, %v614
  %v688 = vsub.f32 %v458, %v619
  %v689 = vsub.f32 %v463, %v624
  %v690 = vsub.f32 %v468, %v629
  %v691 = vsub.f32 %v473, %v634
  %v692 = vsub.f32 %v478, %v639
  %v693 = vsub.f32 %v483, %v644
  %v694 = vsub.f32 %v488, %v649
  %v695 = vsub.f32 %v493, %v654
  %v696 = vsub.f32 %v498, %v659
  %v697 = vsub.f32 %v503, %v664
  %v698 = vmax.f32 %v666, %v670
  %v699 = vmax.f32 %v667, %v671
  %v700 = vmax.f32 %v668, %v672
  %v701 = vmax.f32 %v669, %v673
  %v702 = vmax.f32 %v698, %v674
  %v703 = vmax.f32 %v699, %v675
  %v704 = vmax.f32 %v700, %v676
  %v705 = vmax.f32 %v701, %v677
  %v706 = vmax.f32 %v702, %v678
  %v707 = vmax.f32 %v703, %v679
  %v708 = vmax.f32 %v704, %v680
  %v709 = vmax.f32 %v705, %v681
  %v710 = vmax.f32 %v706, %v682
  %v711 = vmax.f32 %v707, %v683
  %v712 = vmax.f32 %v708, %v684
  %v713 = vmax.f32 %v709, %v685
  %v714 = vmax.f32 %v710, %v686
  %v715 = vmax.f32 %v711, %v687
  %v716 = vmax.f32 %v712, %v688
  %v717 = vmax.f32 %v713, %v689
  %v718 = vmax.f32 %v714, %v690
  %v719 = vmax.f32 %v715, %v691
  %v720 = vmax.f32 %v716, %v692
  %v721 = vmax.f32 %v717, %v693
  %v722 = vmax.f32 %v718, %v694
  %v723 = vmax.f32 %v719, %v695
  %v724 = vmax.f32 %v720, %v696
  %v725 = vmax.f32 %v721, %v697
  %v726 = vmax.f32 %v722, %v723
  %v727 = vmax.f32 %v724, %v725
  %v728 = vmax.f32 %v726, %v727
  %v729 = vrot.slane %v728, 4
  %v730 = vmax.f32 %v728, %v729
  %v731 = vrot.slane %v730, 2
  %v732 = vmax.f32 %v730, %v731
  %v733 = vrot.slane %v732, 1
  %v734 = vmax.f32 %v732, %v733
  %vm735 = vcmp.eq.f32.partialorder %v666, %v734
  %vm736 = vcmp.eq.f32.partialorder %v667, %v734
  %vm737 = vcmp.eq.f32.partialorder %v668, %v734
  %vm738 = vcmp.eq.f32.partialorder %v669, %v734
  %vm739 = vcmp.eq.f32.partialorder %v670, %v734
  %vm740 = vcmp.eq.f32.partialorder %v671, %v734
  %vm741 = vcmp.eq.f32.partialorder %v672, %v734
  %vm742 = vcmp.eq.f32.partialorder %v673, %v734
  %vm743 = vcmp.eq.f32.partialorder %v674, %v734
  %vm744 = vcmp.eq.f32.partialorder %v675, %v734
  %vm745 = vcmp.eq.f32.partialorder %v676, %v734
  %vm746 = vcmp.eq.f32.partialorder %v677, %v734
  %vm747 = vcmp.eq.f32.partialorder %v678, %v734
  %vm748 = vcmp.eq.f32.partialorder %v679, %v734
  %vm749 = vcmp.eq.f32.partialorder %v680, %v734
  %vm750 = vcmp.eq.f32.partialorder %v681, %v734
  %vm751 = vcmp.eq.f32.partialorder %v682, %v734
  %vm752 = vcmp.eq.f32.partialorder %v683, %v734
  %vm753 = vcmp.eq.f32.partialorder %v684, %v734
  %vm754 = vcmp.eq.f32.partialorder %v685, %v734
  %vm755 = vcmp.eq.f32.partialorder %v686, %v734
  %vm756 = vcmp.eq.f32.partialorder %v687, %v734
  %vm757 = vcmp.eq.f32.partialorder %v688, %v734
  %vm758 = vcmp.eq.f32.partialorder %v689, %v734
  %vm759 = vcmp.eq.f32.partialorder %v690, %v734
  %vm760 = vcmp.eq.f32.partialorder %v691, %v734
  %vm761 = vcmp.eq.f32.partialorder %v692, %v734
  %vm762 = vcmp.eq.f32.partialorder %v693, %v734
  %vm763 = vcmp.eq.f32.partialorder %v694, %v734
  %vm764 = vcmp.eq.f32.partialorder %v695, %v734
  %vm765 = vcmp.eq.f32.partialorder %v696, %v734
  %vm766 = vcmp.eq.f32.partialorder %v697, %v734
  %v767 = vsel %vm735, %v37, 256
  %v768 = vsel %vm736, %v38, 256
  %v769 = vsel %vm737, %v39, 256
  %v770 = vsel %vm738, %v40, 256
  %v771 = vsel %vm739, %v41, 256
  %v772 = vsel %vm740, %v42, 256
  %v773 = vsel %vm741, %v43, 256
  %v774 = vsel %vm742, %v44, 256
  %v775 = vsel %vm743, %v45, 256
  %v776 = vsel %vm744, %v46, 256
  %v777 = vsel %vm745, %v47, 256
  %v778 = vsel %vm746, %v48, 256
  %v779 = vsel %vm747, %v49, 256
  %v780 = vsel %vm748, %v50, 256
  %v781 = vsel %vm749, %v51, 256
  %v782 = vsel %vm750, %v52, 256
  %v783 = vsel %vm751, %v53, 256
  %v784 = vsel %vm752, %v54, 256
  %v785 = vsel %vm753, %v55, 256
  %v786 = vsel %vm754, %v56, 256
  %v787 = vsel %vm755, %v57, 256
  %v788 = vsel %vm756, %v58, 256
  %v789 = vsel %vm757, %v59, 256
  %v790 = vsel %vm758, %v60, 256
  %v791 = vsel %vm759, %v61, 256
  %v792 = vsel %vm760, %v62, 256
  %v793 = vsel %vm761, %v63, 256
  %v794 = vsel %vm762, %v64, 256
  %v795 = vsel %vm763, %v65, 256
  %v796 = vsel %vm764, %v66, 256
  %v797 = vsel %vm765, %v67, 256
  %v798 = vsel %vm766, %v68, 256
  %vm799 = vcmp.lt.s32.totalorder %v767, %v771
  %v800 = vsel %vm799, %v767, %v771
  %vm801 = vcmp.lt.s32.totalorder %v768, %v772
  %v802 = vsel %vm801, %v768, %v772
  %vm803 = vcmp.lt.s32.totalorder %v769, %v773
  %v804 = vsel %vm803, %v769, %v773
  %vm805 = vcmp.lt.s32.totalorder %v770, %v774
  %v806 = vsel %vm805, %v770, %v774
  %vm807 = vcmp.lt.s32.totalorder %v800, %v775
  %v808 = vsel %vm807, %v800, %v775
  %vm809 = vcmp.lt.s32.totalorder %v802, %v776
  %v810 = vsel %vm809, %v802, %v776
  %vm811 = vcmp.lt.s32.totalorder %v804, %v777
  %v812 = vsel %vm811, %v804, %v777
  %vm813 = vcmp.lt.s32.totalorder %v806, %v778
  %v814 = vsel %vm813, %v806, %v778
  %vm815 = vcmp.lt.s32.totalorder %v808, %v779
  %v816 = vsel %vm815, %v808, %v779
  %vm817 = vcmp.lt.s32.totalorder %v810, %v780
  %v818 = vsel %vm817, %v810, %v780
  %vm819 = vcmp.lt.s32.totalorder %v812, %v781
  %v820 = vsel %vm819, %v812, %v781
  %vm821 = vcmp.lt.s32.totalorder %v814, %v782
  %v822 = vsel %vm821, %v814, %v782
  %vm823 = vcmp.lt.s32.totalorder %v816, %v783
  %v824 = vsel %vm823, %v816, %v783
  %vm825 = vcmp.lt.s32.totalorder %v818, %v784
  %v826 = vsel %vm825, %v818, %v784
  %vm827 = vcmp.lt.s32.totalorder %v820, %v785
  %v828 = vsel %vm827, %v820, %v785
  %vm829 = vcmp.lt.s32.totalorder %v822, %v786
  %v830 = vsel %vm829, %v822, %v786
  %vm831 = vcmp.lt.s32.totalorder %v824, %v787
  %v832 = vsel %vm831, %v824, %v787
  %vm833 = vcmp.lt.s32.totalorder %v826, %v788
  %v834 = vsel %vm833, %v826, %v788
  %vm835 = vcmp.lt.s32.totalorder %v828, %v789
  %v836 = vsel %vm835, %v828, %v789
  %vm837 = vcmp.lt.s32.totalorder %v830, %v790
  %v838 = vsel %vm837, %v830, %v790
  %vm839 = vcmp.lt.s32.totalorder %v832, %v791
  %v840 = vsel %vm839, %v832, %v791
  %vm841 = vcmp.lt.s32.totalorder %v834, %v792
  %v842 = vsel %vm841, %v834, %v792
  %vm843 = vcmp.lt.s32.totalorder %v836, %v793
  %v844 = vsel %vm843, %v836, %v793
  %vm845 = vcmp.lt.s32.totalorder %v838, %v794
  %v846 = vsel %vm845, %v838, %v794
  %vm847 = vcmp.lt.s32.totalorder %v840, %v795
  %v848 = vsel %vm847, %v840, %v795
  %vm849 = vcmp.lt.s32.totalorder %v842, %v796
  %v850 = vsel %vm849, %v842, %v796
  %vm851 = vcmp.lt.s32.totalorder %v844, %v797
  %v852 = vsel %vm851, %v844, %v797
  %vm853 = vcmp.lt.s32.totalorder %v846, %v798
  %v854 = vsel %vm853, %v846, %v798
  %vm855 = vcmp.lt.s32.totalorder %v848, %v850
  %v856 = vsel %vm855, %v848, %v850
  %vm857 = vcmp.lt.s32.totalorder %v852, %v854
  %v858 = vsel %vm857, %v852, %v854
  %vm859 = vcmp.lt.s32.totalorder %v856, %v858
  %v860 = vsel %vm859, %v856, %v858
  %v861 = vrot.slane %v860, 4
  %vm862 = vcmp.lt.s32.totalorder %v860, %v861
  %v863 = vsel %vm862, %v860, %v861
  %v864 = vrot.slane %v863, 2
  %vm865 = vcmp.lt.s32.totalorder %v863, %v864
  %v866 = vsel %vm865, %v863, %v864
  %v867 = vrot.slane %v866, 1
  %vm868 = vcmp.lt.s32.totalorder %v866, %v867
  %v869 = vsel %vm868, %v866, %v867
  %v870 = vstv %s69
  %v871 = vadd.s32 %v869, %v870
  %vm872 = vcmp.gt.f32.partialorder %v734, %v70
  %v873 = vsel %vm872, %v734, %v70
  %v874 = vsel %vm872, %v871, %v71
  %875 = vst [vmem:[#allocation2] sm:$0x1] %v873
  %876 = vst [vmem:[#allocation3] sm:$0x1] %v874
  // Predicated region
  $region18: #{euclidean_codebook_forward.1} parent=0 // pred_check
    %p877 = pneg %p14
  $region19: #{euclidean_codebook_forward.1} parent=0 // pred_check_branch
    %879 = sbr.rel (%p877) target = $region21
  $region20: #{euclidean_codebook_forward.1} parent=0 // pred_region
    %v880 = vld [vmem:[#allocation3] sm:$0x1]
    %v881 = vlaneseq
    %v882 = vshrl.u32 %v881, 7
    %v883 = vsub.s32 0, %v882
    %v884 = vrot.slane %v880, %v883
    %885 = vst [vmem:[%s3] sm:$0xff] %v884
  $region21: #{euclidean_codebook_forward.1} parent=0 // pred_fallthru
    _
  // Predicated region
  $region22: #{euclidean_codebook_forward.1} parent=0 // pred_check
    _
  $region23: #{euclidean_codebook_forward.1} parent=0 // pred_check_branch
    %887 = sbr.rel (0) target = $region25
  $region24: #{euclidean_codebook_forward.1} parent=0 // pred_region
    _
  $region25: #{euclidean_codebook_forward.1} parent=0 // pred_fallthru
    _
  // Predicated region
  $region26: #{euclidean_codebook_forward.1} parent=0 // pred_check
    _
  $region27: #{euclidean_codebook_forward.1} parent=0 // pred_check_branch
    %889 = sbr.rel (0) target = $region29
  $region28: #{euclidean_codebook_forward.1} parent=0 // pred_region
    _
  $region29: #{euclidean_codebook_forward.1} parent=0 // pred_fallthru
    _

</llo_original>
